<compile_context>
chip_gen: v7x
topology: tpu7x:2x2x1
jax: 0.10.0
libtpu: 0.0.40
codegen_flags: <defaults>
</compile_context>

<pallas_src>
import functools

import jax
import jax.numpy as jnp
from jax.experimental import pallas as pl
from jax.experimental.pallas import tpu as pltpu


def _vmem_limit_bytes():
    """Per-generation VMEM budget (do not hardcode 64 MiB == all of v7x)."""
    try:
        cap = getattr(pltpu.get_tpu_info(), "vmem_capacity_bytes", None)
        if cap:
            return int(cap) * 3 // 4        # ~48 MiB v7x, ~96 MiB v5e/v6e
    except Exception:
        pass
    return 48 * 1024 * 1024                 # conservative fallback


def _pick_tile_s(hw, cin, cout, x_bytes, y_bytes, vmem_limit, target):
    """Spatial (lane) tile: a multiple of 128 or the full extent, sized so the
    double-buffered working set stays well inside the VMEM budget."""
    if hw % 128 == 0:
        tile = min(target, hw)
    elif hw < target:
        tile = hw                           # single full-extent block
    else:
        tile = target                       # ragged last block (masked)

    def working(t):
        return (2 * cin * t * x_bytes       # x tile, double-buffered
                + 2 * cout * t * y_bytes    # y tile, double-buffered
                + 2 * cin * cout * x_bytes)  # weight block

    budget = vmem_limit // 2                # leave slack for internal scratch
    while tile > 128 and working(tile) > budget:
        tile = max(128, (tile // 2) // 128 * 128)
    return tile


# ---------------------------------------------------------------------------
# Phase 1: y = W @ x (1x1 conv on the MXU) + shifted per-channel sum / sumsq.
# ---------------------------------------------------------------------------
def _conv_stats_kernel(x_ref, w_ref, y_ref, stats_ref, acc_ref, *,
                       hw, tile_s, inv_valid0, ragged):
    s = pl.program_id(1)

    # (Cout, Cin) @ (Cin, tile_s) -> (Cout, tile_s), f32 MXU accumulation.
    y = jnp.dot(w_ref[...], x_ref[0], preferred_element_type=jnp.float32)
    y_ref[0] = y.astype(y_ref.dtype)        # bf16 store halves y HBM traffic

    if ragged:
        # Lanes past the true spatial extent (last tile only) must not
        # contribute to the statistics.
        pos = jax.lax.broadcasted_iota(jnp.int32, y.shape, 1) + s * tile_s
        mask = pos < hw

    @pl.when(s == 0)
    def _():
        # Per-batch shift K = mean of the first tile; makes the single-pass
        # variance numerically robust (no E[y^2] - mean^2 cancellation).
        y0 = jnp.where(mask, y, 0.0) if ragged else y
        k0 = jnp.sum(y0, axis=1, keepdims=True) * inv_valid0     # (Cout, 1)
        acc_ref[...] = jnp.concatenate(
            [k0, jnp.zeros((k0.shape[0], 2), jnp.float32)], axis=1)

    d = y - acc_ref[:, 0:1]
    if ragged:
        d = jnp.where(mask, d, 0.0)
    ds = jnp.sum(d, axis=1, keepdims=True)       # lane reduce -> XLU slot
    dq = jnp.sum(d * d, axis=1, keepdims=True)
    acc_ref[:, 1:3] += jnp.concatenate([ds, dq], axis=1)

    @pl.when(s == pl.num_programs(1) - 1)
    def _():
        stats_ref[0] = acc_ref[...]              # [K, sum(y-K), sum((y-K)^2)]


# ---------------------------------------------------------------------------
# Phase 2: out = relu(y * scale + shift), scale/shift precomputed per channel.
# ---------------------------------------------------------------------------
def _scale_shift_relu_kernel(p_ref, y_ref, o_ref):
    scale = p_ref[:, 0:1]                        # (Cout, 1)
    shift = p_ref[:, 1:2]
    y = y_ref[0].astype(jnp.float32)
    o_ref[0] = jnp.maximum(y * scale + shift, 0.0).astype(o_ref.dtype)


# ---------------------------------------------------------------------------
# Wrapper: NCHW in / NCHW out, no transposes or pads outside the kernels.
# ---------------------------------------------------------------------------
def aspp_forward(x_nchw, conv_w_oihw, gamma, beta, eps=1e-5,
                 compute_dtype=jnp.bfloat16, y_dtype=None, out_dtype=None,
                 target_tile_s=2048):
    n, cin, h, w_sp = x_nchw.shape
    cout = conv_w_oihw.shape[0]
    hw = h * w_sp
    y_dtype = compute_dtype if y_dtype is None else y_dtype
    out_dtype = x_nchw.dtype if out_dtype is None else out_dtype

    # NCHW consumed directly: merging (H, W) is a free reshape.
    x3d = x_nchw.reshape(n, cin, hw)
    if x3d.dtype != compute_dtype:
        # Zero cost when the surrounding model already runs in compute_dtype.
        x3d = x3d.astype(compute_dtype)
    w2d = conv_w_oihw[:, :, 0, 0].astype(compute_dtype)       # (Cout, Cin)

    vmem_limit = _vmem_limit_bytes()
    tile_s = _pick_tile_s(hw, cin, cout,
                          jnp.dtype(compute_dtype).itemsize,
                          jnp.dtype(y_dtype).itemsize,
                          vmem_limit, target_tile_s)
    n_s = pl.cdiv(hw, tile_s)
    ragged = (hw % tile_s) != 0

    kernel1 = functools.partial(
        _conv_stats_kernel, hw=hw, tile_s=tile_s,
        inv_valid0=1.0 / float(min(tile_s, hw)), ragged=ragged)

    # ----- Phase 1: 1x1 conv + per-batch shifted channel statistics --------
    y3d, stats = pl.pallas_call(
        kernel1,
        out_shape=(jax.ShapeDtypeStruct((n, cout, hw), y_dtype),
                   jax.ShapeDtypeStruct((n, cout, 3), jnp.float32)),
        grid=(n, n_s),
        in_specs=[
            pl.BlockSpec((1, cin, tile_s), lambda b, s: (b, 0, s)),
            # Constant block: fetched once.  TODO(synk): on v7x,
            # pipeline_mode=pl.Buffered(1) would also drop its second buffer.
            pl.BlockSpec((cout, cin), lambda b, s: (0, 0)),
        ],
        out_specs=[
            pl.BlockSpec((1, cout, tile_s), lambda b, s: (b, 0, s)),
            pl.BlockSpec((1, cout, 3), lambda b, s: (b, 0, 0)),
        ],
        scratch_shapes=[pltpu.VMEM((cout, 3), jnp.float32)],
        compiler_params=pltpu.CompilerParams(
            dimension_semantics=("parallel", "arbitrary"),
            vmem_limit_bytes=vmem_limit),
    )(x3d, w2d)

    # Tiny (N, Cout, 3) wrapper math: combine per-batch shifted stats via
    # Chan's parallel-variance formula, fold gamma/beta/eps into scale/shift.
    m = float(hw)
    k_b = stats[:, :, 0]
    s_b = stats[:, :, 1]
    q_b = stats[:, :, 2]
    mean_b = k_b + s_b / m                                    # (N, Cout)
    m2_b = q_b - s_b * s_b / m                                # sum((y-mean_b)^2)
    mean = jnp.mean(mean_b, axis=0)                           # (Cout,)
    var = (jnp.sum(m2_b, axis=0)
           + m * jnp.sum((mean_b - mean) ** 2, axis=0)) / (n * m)   # biased
    inv_std = jax.lax.rsqrt(var + eps)
    scale = gamma.astype(jnp.float32) * inv_std
    shift = beta.astype(jnp.float32) - mean * scale
    params = jnp.stack([scale, shift], axis=1)                # (Cout, 2)

    # ----- Phase 2: normalize + ReLU (pure FMA stream, fully parallel) -----
    alias = {1: 0} if jnp.dtype(y_dtype) == jnp.dtype(out_dtype) else {}
    out3d = pl.pallas_call(
        _scale_shift_relu_kernel,
        out_shape=jax.ShapeDtypeStruct((n, cout, hw), out_dtype),
        grid=(n, n_s),
        in_specs=[
            pl.BlockSpec((cout, 2), lambda b, s: (0, 0)),
            pl.BlockSpec((1, cout, tile_s), lambda b, s: (b, 0, s)),
        ],
        out_specs=pl.BlockSpec((1, cout, tile_s), lambda b, s: (b, 0, s)),
        input_output_aliases=alias,
        compiler_params=pltpu.CompilerParams(
            dimension_semantics=("parallel", "parallel"),
            vmem_limit_bytes=vmem_limit),
    )(params, y3d)

    return out3d.reshape(n, cout, h, w_sp)     # free reshape back to NCHW


# ---------------------------------------------------------------------------
# Pure-JAX reference (Conv1x1 + BatchNorm2d training mode + ReLU).
# ---------------------------------------------------------------------------
def _reference(x_nchw, conv_w_oihw, gamma, beta, eps=1e-5):
    cout = conv_w_oihw.shape[0]
    y = jnp.einsum("nchw,oc->nohw", x_nchw, conv_w_oihw[:, :, 0, 0])
    mean = jnp.mean(y, axis=(0, 2, 3), keepdims=True)
    var = jnp.mean((y - mean) ** 2, axis=(0, 2, 3), keepdims=True)
    y_hat = (y - mean) / jnp.sqrt(var + eps)
    out = y_hat * gamma.reshape(1, cout, 1, 1) + beta.reshape(1, cout, 1, 1)
    return jnp.maximum(out, 0.0)


if __name__ == "__main__":
    key = jax.random.PRNGKey(0)
    k_x, k_w = jax.random.split(key)

    N, C_IN, C_OUT, H, W = 2, 4, 8, 16, 16

    x = jax.random.normal(k_x, (N, C_IN, H, W), dtype=jnp.float32)
    conv_w = jax.random.normal(k_w, (C_OUT, C_IN, 1, 1), dtype=jnp.float32) * 0.1
    gamma = jnp.ones((C_OUT,), dtype=jnp.float32)   # BatchNorm2d default weight
    beta = jnp.zeros((C_OUT,), dtype=jnp.float32)   # BatchNorm2d default bias

    ref = _reference(x, conv_w, gamma, beta)

    # Exact path (f32 compute, f32 y round trip): tight tolerance.
    fwd_f32 = jax.jit(functools.partial(aspp_forward, compute_dtype=jnp.float32))
    out_f32 = jax.block_until_ready(fwd_f32(x, conv_w, gamma, beta))
    assert out_f32.shape == (N, C_OUT, H, W)
    assert jnp.allclose(out_f32, ref, atol=1e-4, rtol=1e-4), (
        float(jnp.max(jnp.abs(out_f32 - ref))))

    # Default fast path (bf16 MXU inputs, bf16 y storage, f32 output).
    fwd_fast = jax.jit(aspp_forward)
    out_fast = jax.block_until_ready(fwd_fast(x, conv_w, gamma, beta))
    assert out_fast.shape == (N, C_OUT, H, W)
    assert out_fast.dtype == jnp.float32
    assert jnp.allclose(out_fast, ref, atol=1e-1, rtol=1e-2), (
        float(jnp.max(jnp.abs(out_fast - ref))))

    print("KERNEL_OK")
</pallas_src>

<mosaic_0001>
module attributes {stable_mosaic.version = 11 : i64} {
  func.func @_conv_stats_kernel(%arg0: i32, %arg1: i32, %arg2: memref<1x4x256xf32, #tpu.memory_space<vmem>>, %arg3: memref<8x4xf32, #tpu.memory_space<vmem>>, %arg4: memref<1x8x256xf32, #tpu.memory_space<vmem>>, %arg5: memref<1x8x3xf32, #tpu.memory_space<vmem>>, %arg6: memref<8x3xf32, #tpu.memory_space<vmem>>) attributes {dimension_semantics = [#tpu.dimension_semantics<parallel>, #tpu.dimension_semantics<arbitrary>], iteration_bounds = array<i64: 2, 1>, scalar_prefetch = 0 : i64, scratch_operands = 1 : i64, tpu.core_type = #tpu.core_type<tc>, window_params = [{transform_indices = @transform_0, window_bounds = array<i64: 1, 4, 256>}, {pipeline_mode = #tpu.pipeline_mode<synchronous>, transform_indices = @transform_1, window_bounds = array<i64: 8, 4>}, {transform_indices = @transform_2, window_bounds = array<i64: 1, 8, 256>}, {transform_indices = @transform_3, window_bounds = array<i64: 1, 8, 3>}]} {
    %c0 = arith.constant 0 : index
    %c0_0 = arith.constant 0 : index
    %0 = vector.load %arg3[%c0, %c0_0] : memref<8x4xf32, #tpu.memory_space<vmem>>, vector<8x4xf32>
    %c0_1 = arith.constant 0 : index
    %c0_2 = arith.constant 0 : index
    %c0_3 = arith.constant 0 : index
    %1 = vector.load %arg2[%c0_1, %c0_2, %c0_3] : memref<1x4x256xf32, #tpu.memory_space<vmem>>, vector<1x4x256xf32>
    %2 = vector.shape_cast %1 : vector<1x4x256xf32> to vector<4x256xf32>
    %cst = arith.constant dense<0.000000e+00> : vector<8x256xf32>
    %3 = tpu.matmul %0, %2, %cst {dimension_numbers = #tpu.dot_dimension_numbers<[1], [0], [0], [1], [0, 0, 1, 1], [], []>} : vector<8x4xf32>, vector<4x256xf32>, vector<8x256xf32> -> vector<8x256xf32>
    %c0_4 = arith.constant 0 : index
    %c0_5 = arith.constant 0 : index
    %c0_6 = arith.constant 0 : index
    %4 = vector.load %arg4[%c0_4, %c0_5, %c0_6] : memref<1x8x256xf32, #tpu.memory_space<vmem>>, vector<1x8x256xf32>
    %5 = vector.shape_cast %4 : vector<1x8x256xf32> to vector<8x256xf32>
    %6 = vector.shape_cast %3 : vector<8x256xf32> to vector<1x8x256xf32>
    tpu.vector_store %arg4[%c0_4, %c0_5, %c0_6], %6 {strides = array<i32>} : memref<1x8x256xf32, #tpu.memory_space<vmem>>, vector<1x8x256xf32>,
    %c0_i32 = arith.constant 0 : i32
    %7 = arith.cmpi eq, %arg1, %c0_i32 : i32
    %8 = arith.extui %7 : i1 to i32
    %c0_i32_7 = arith.constant 0 : i32
    %9 = arith.cmpi ne, %8, %c0_i32_7 : i32
    scf.if %9 {
      %cst_17 = arith.constant dense<0.000000e+00> : vector<8xf32>
      %25 = vector.multi_reduction <add>, %3, %cst_17 [1] : vector<8x256xf32> to vector<8xf32>
      %26 = vector.shape_cast %25 : vector<8xf32> to vector<8x1xf32>
      %cst_18 = arith.constant 3.906250e-03 : f32
      %27 = vector.broadcast %cst_18 : f32 to vector<8x1xf32>
      %28 = arith.mulf %26, %27 : vector<8x1xf32>
      %cst_19 = arith.constant 0.000000e+00 : f32
      %29 = vector.broadcast %cst_19 : f32 to vector<8x2xf32>
      %30 = tpu.concatenate %28, %29 in 1 : vector<8x1xf32>, vector<8x2xf32> -> vector<8x3xf32>
      %c0_20 = arith.constant 0 : index
      %c0_21 = arith.constant 0 : index
      %31 = vector.load %arg6[%c0_20, %c0_21] : memref<8x3xf32, #tpu.memory_space<vmem>>, vector<8x3xf32>
      tpu.vector_store %arg6[%c0_20, %c0_21], %30 {strides = array<i32>} : memref<8x3xf32, #tpu.memory_space<vmem>>, vector<8x3xf32>,
    } else {
    }
    %c0_8 = arith.constant 0 : index
    %c0_9 = arith.constant 0 : index
    %10 = vector.load %arg6[%c0_8, %c0_9] : memref<8x3xf32, #tpu.memory_space<vmem>>, vector<8x1xf32>
    %11 = vector.broadcast %10 : vector<8x1xf32> to vector<8x256xf32>
    %12 = arith.subf %3, %11 : vector<8x256xf32>
    %cst_10 = arith.constant dense<0.000000e+00> : vector<8xf32>
    %13 = vector.multi_reduction <add>, %12, %cst_10 [1] : vector<8x256xf32> to vector<8xf32>
    %14 = vector.shape_cast %13 : vector<8xf32> to vector<8x1xf32>
    %15 = arith.mulf %12, %12 : vector<8x256xf32>
    %cst_11 = arith.constant dense<0.000000e+00> : vector<8xf32>
    %16 = vector.multi_reduction <add>, %15, %cst_11 [1] : vector<8x256xf32> to vector<8xf32>
    %17 = vector.shape_cast %16 : vector<8xf32> to vector<8x1xf32>
    %c0_12 = arith.constant 0 : index
    %c1 = arith.constant 1 : index
    %18 = vector.load %arg6[%c0_12, %c1] : memref<8x3xf32, #tpu.memory_space<vmem>>, vector<8x2xf32>
    %19 = tpu.concatenate %14, %17 in 1 : vector<8x1xf32>, vector<8x1xf32> -> vector<8x2xf32>
    %20 = arith.addf %18, %19 : vector<8x2xf32>
    %c0_13 = arith.constant 0 : index
    %c1_14 = arith.constant 1 : index
    %21 = vector.load %arg6[%c0_13, %c1_14] : memref<8x3xf32, #tpu.memory_space<vmem>>, vector<8x2xf32>
    tpu.vector_store %arg6[%c0_13, %c1_14], %20 {strides = array<i32>} : memref<8x3xf32, #tpu.memory_space<vmem>>, vector<8x2xf32>,
    %c0_i32_15 = arith.constant 0 : i32
    %22 = arith.cmpi eq, %arg1, %c0_i32_15 : i32
    %23 = arith.extui %22 : i1 to i32
    %c0_i32_16 = arith.constant 0 : i32
    %24 = arith.cmpi ne, %23, %c0_i32_16 : i32
    scf.if %24 {
      %c0_17 = arith.constant 0 : index
      %c0_18 = arith.constant 0 : index
      %25 = vector.load %arg6[%c0_17, %c0_18] : memref<8x3xf32, #tpu.memory_space<vmem>>, vector<8x3xf32>
      %c0_19 = arith.constant 0 : index
      %c0_20 = arith.constant 0 : index
      %c0_21 = arith.constant 0 : index
      %26 = vector.load %arg5[%c0_19, %c0_20, %c0_21] : memref<1x8x3xf32, #tpu.memory_space<vmem>>, vector<1x8x3xf32>
      %27 = vector.shape_cast %26 : vector<1x8x3xf32> to vector<8x3xf32>
      %28 = vector.shape_cast %25 : vector<8x3xf32> to vector<1x8x3xf32>
      tpu.vector_store %arg5[%c0_19, %c0_20, %c0_21], %28 {strides = array<i32>} : memref<1x8x3xf32, #tpu.memory_space<vmem>>, vector<1x8x3xf32>,
    } else {
    }
    return
  }
  func.func @transform_0(%arg0: i32, %arg1: i32) -> (i32, i32, i32) {
    %c0_i32 = arith.constant 0 : i32
    %c0_i32_0 = arith.constant 0 : i32
    return %arg0, %c0_i32, %arg1 : i32, i32, i32
  }
  func.func @transform_1(%arg0: i32, %arg1: i32) -> (i32, i32) {
    %c0_i32 = arith.constant 0 : i32
    %c0_i32_0 = arith.constant 0 : i32
    %c0_i32_1 = arith.constant 0 : i32
    return %c0_i32, %c0_i32_0 : i32, i32
  }
  func.func @transform_2(%arg0: i32, %arg1: i32) -> (i32, i32, i32) {
    %c0_i32 = arith.constant 0 : i32
    %c0_i32_0 = arith.constant 0 : i32
    return %arg0, %c0_i32, %arg1 : i32, i32, i32
  }
  func.func @transform_3(%arg0: i32, %arg1: i32) -> (i32, i32, i32) {
    %c0_i32 = arith.constant 0 : i32
    %c0_i32_0 = arith.constant 0 : i32
    %c0_i32_1 = arith.constant 0 : i32
    return %arg0, %c0_i32, %c0_i32_0 : i32, i32, i32
  }
}

module attributes {stable_mosaic.version = 11 : i64} {
  func.func @_scale_shift_relu_kernel(%arg0: i32, %arg1: i32, %arg2: memref<8x2xf32, #tpu.memory_space<vmem>>, %arg3: memref<1x8x256xf32, #tpu.memory_space<vmem>>, %arg4: memref<1x8x256xf32, #tpu.memory_space<vmem>>) attributes {dimension_semantics = [#tpu.dimension_semantics<parallel>, #tpu.dimension_semantics<parallel>], iteration_bounds = array<i64: 2, 1>, scalar_prefetch = 0 : i64, scratch_operands = 0 : i64, tpu.core_type = #tpu.core_type<tc>, window_params = [{pipeline_mode = #tpu.pipeline_mode<synchronous>, transform_indices = @transform_0, window_bounds = array<i64: 8, 2>}, {transform_indices = @transform_1, window_bounds = array<i64: 1, 8, 256>}, {transform_indices = @transform_2, window_bounds = array<i64: 1, 8, 256>}]} {
    %c0 = arith.constant 0 : index
    %c0_0 = arith.constant 0 : index
    %0 = vector.load %arg2[%c0, %c0_0] : memref<8x2xf32, #tpu.memory_space<vmem>>, vector<8x1xf32>
    %c0_1 = arith.constant 0 : index
    %c1 = arith.constant 1 : index
    %1 = vector.load %arg2[%c0_1, %c1] : memref<8x2xf32, #tpu.memory_space<vmem>>, vector<8x1xf32>
    %c0_2 = arith.constant 0 : index
    %c0_3 = arith.constant 0 : index
    %c0_4 = arith.constant 0 : index
    %2 = vector.load %arg3[%c0_2, %c0_3, %c0_4] : memref<1x8x256xf32, #tpu.memory_space<vmem>>, vector<1x8x256xf32>
    %3 = vector.shape_cast %2 : vector<1x8x256xf32> to vector<8x256xf32>
    %4 = vector.broadcast %0 : vector<8x1xf32> to vector<8x256xf32>
    %5 = arith.mulf %3, %4 : vector<8x256xf32>
    %6 = vector.broadcast %1 : vector<8x1xf32> to vector<8x256xf32>
    %7 = arith.addf %5, %6 : vector<8x256xf32>
    %cst = arith.constant 0.000000e+00 : f32
    %8 = vector.broadcast %cst : f32 to vector<8x256xf32>
    %9 = arith.maximumf %7, %8 : vector<8x256xf32>
    %c0_5 = arith.constant 0 : index
    %c0_6 = arith.constant 0 : index
    %c0_7 = arith.constant 0 : index
    %10 = vector.load %arg4[%c0_5, %c0_6, %c0_7] : memref<1x8x256xf32, #tpu.memory_space<vmem>>, vector<1x8x256xf32>
    %11 = vector.shape_cast %10 : vector<1x8x256xf32> to vector<8x256xf32>
    %12 = vector.shape_cast %9 : vector<8x256xf32> to vector<1x8x256xf32>
    tpu.vector_store %arg4[%c0_5, %c0_6, %c0_7], %12 {strides = array<i32>} : memref<1x8x256xf32, #tpu.memory_space<vmem>>, vector<1x8x256xf32>,
    return
  }
  func.func @transform_0(%arg0: i32, %arg1: i32) -> (i32, i32) {
    %c0_i32 = arith.constant 0 : i32
    %c0_i32_0 = arith.constant 0 : i32
    %c0_i32_1 = arith.constant 0 : i32
    return %c0_i32, %c0_i32_0 : i32, i32
  }
  func.func @transform_1(%arg0: i32, %arg1: i32) -> (i32, i32, i32) {
    %c0_i32 = arith.constant 0 : i32
    %c0_i32_0 = arith.constant 0 : i32
    return %arg0, %c0_i32, %arg1 : i32, i32, i32
  }
  func.func @transform_2(%arg0: i32, %arg1: i32) -> (i32, i32, i32) {
    %c0_i32 = arith.constant 0 : i32
    %c0_i32_0 = arith.constant 0 : i32
    return %arg0, %c0_i32, %arg1 : i32, i32, i32
  }
}

</mosaic_0001>

<llo_original>
// kernel: aspp_forward.3
$region0: #{aspp_forward.3}
  #allocation0 [shape = 'u32[]', space=smem, size = 0x4, offset = 0x4, fixed_abs, tag = 'smem constant byte address 0x4 - core index']
  #allocation1 [shape = 'u32[144,128]{1,0:T(1,128)}', space=vmem, size = 0x12000, scoped, tag = 'internal scratch']
  %s0 = inlined_call_operand.vmem [shape: f32[8,2], index: 0, kind: input, shape index: {}]
  %s1 = inlined_call_operand.vmem [shape: f32[2,8,256], index: 1, kind: input, shape index: {}, may-alias: {1,2}]
  %s2 = inlined_call_operand.vmem [shape: f32[2,8,256], index: 2, kind: output, shape index: {}, may-alias: {1,2}]
  %s3 = sld [smem:[#allocation0]]
  $region41: #{aspp_forward.3} parent=0
    _
  %s5 = ssub.s32 1, %s3
  %s6 = scalar_select 0, %s5, %s3
  loop: start=0, step=1, limit=4
  $region2: #{aspp_forward.3} parent=0 // loop_pre_header
    _
  $region3: #{aspp_forward.3} parent=0 // loop_header
    %s8 = sphi 0, %s12
    %p9 = scmp.ge.s32.totalorder %s8, 4
    %s15 = sphi 0, %s27
    %s16 = sphi 0, %s23
    %s17 = sphi 0, %s15
    %s18 = sphi 0, %s16
    %s19 = sphi 0, %s17
    %s20 = sphi 0, %s18
    %s28 = sphi 0, %s28
    %s30 = sphi 0, %s28
    %s31 = sphi 0, %s30
    %s45 = sphi 0, %s31
    %s53 = sphi 0, %s55
    %s56 = sphi 0, %s53
    %s57 = sphi 0, %s56
    %s73 = sphi 0, %s57
    %s81 = sphi 0, %s83
    %s84 = sphi 0, %s81
    %s85 = sphi 0, %s84
    %s101 = sphi 0, %s85
  $region4: #{aspp_forward.3} parent=0 // loop_header_branch
    %11 = sbr.rel (%p9) target = $region8
  $region5: #{aspp_forward.3} parent=0 // loop_body
    %s13 = ssub.s32 %s8, 1
    %s14 = ssub.s32 %s8, 2
    %s21 = sadd.s32 1, %s16
    %p22 = scmp.ge.s32.totalorder %s21, 1
    %s23 = scalar_select %p22, 0, %s21
    %s24 = sadd.s32 1, %s15
    %s25 = scalar_select %p22, %s24, %s15
    %p26 = scmp.ge.s32.totalorder %s25, 2
    %s27 = scalar_select %p26, 0, %s25
    %s29 = sadd.s32 %s28, 1
    %p32 = scmp.eq.s32.totalorder %s8, 1
    %p33 = scmp.ne.s32.totalorder %s28, %s30
    %p34 = scmp.eq.s32.totalorder %s8, 0
    %p35 = por %p33, %p34
    %p36 = scmp.ne.s32.totalorder %s28, %s30
    %p37 = scmp.eq.s32.totalorder %s13, 1
    %p38 = por %p36, %p37
    %p39 = scmp.ne.s32.totalorder %s30, %s31
    %p40 = scmp.eq.s32.totalorder %s13, 0
    %p41 = por %p39, %p40
    %p42 = scmp.ne.s32.totalorder %s30, %s31
    %p43 = scmp.eq.s32.totalorder %s14, 1
    %p44 = por %p42, %p43
    %p46 = scmp.ne.s32.totalorder %s31, %s45
    %p47 = scmp.eq.s32.totalorder %s14, 0
    %p48 = por %p46, %p47
    %s49 = ssub.s32 %s15, %s27
    %s50 = ssub.s32 %s16, %s23
    %s51 = sor.u32 %s49, %s50
    %p52 = scmp.eq.s32.totalorder %s51, 0
    %s54 = sadd.s32 %s53, 1
    %s55 = scalar_select %p52, %s53, %s54
    %p58 = pneg %p52
    %p59 = scmp.eq.s32.totalorder %s8, 1
    %p60 = por %p58, %p59
    %p61 = scmp.ne.s32.totalorder %s53, %s56
    %p62 = scmp.eq.s32.totalorder %s8, 0
    %p63 = por %p61, %p62
    %p64 = scmp.ne.s32.totalorder %s53, %s56
    %p65 = scmp.eq.s32.totalorder %s13, 1
    %p66 = por %p64, %p65
    %p67 = scmp.ne.s32.totalorder %s56, %s57
    %p68 = scmp.eq.s32.totalorder %s13, 0
    %p69 = por %p67, %p68
    %p70 = scmp.ne.s32.totalorder %s56, %s57
    %p71 = scmp.eq.s32.totalorder %s14, 1
    %p72 = por %p70, %p71
    %p74 = scmp.ne.s32.totalorder %s57, %s73
    %p75 = scmp.eq.s32.totalorder %s14, 0
    %p76 = por %p74, %p75
    %s77 = ssub.s32 %s15, %s27
    %s78 = ssub.s32 %s16, %s23
    %s79 = sor.u32 %s77, %s78
    %p80 = scmp.eq.s32.totalorder %s79, 0
    %s82 = sadd.s32 %s81, 1
    %s83 = scalar_select %p80, %s81, %s82
    %p86 = pneg %p80
    %p87 = scmp.eq.s32.totalorder %s8, 1
    %p88 = por %p86, %p87
    %p89 = scmp.ne.s32.totalorder %s81, %s84
    %p90 = scmp.eq.s32.totalorder %s8, 0
    %p91 = por %p89, %p90
    %p92 = scmp.ne.s32.totalorder %s81, %s84
    %p93 = scmp.eq.s32.totalorder %s13, 1
    %p94 = por %p92, %p93
    %p95 = scmp.ne.s32.totalorder %s84, %s85
    %p96 = scmp.eq.s32.totalorder %s13, 0
    %p97 = por %p95, %p96
    %p98 = scmp.ne.s32.totalorder %s84, %s85
    %p99 = scmp.eq.s32.totalorder %s14, 1
    %p100 = por %p98, %p99
    %p102 = scmp.ne.s32.totalorder %s85, %s101
    %p103 = scmp.eq.s32.totalorder %s14, 0
    %p104 = por %p102, %p103
    %p105 = scmp.le.s32.totalorder 1, %s8
    %p106 = scmp.lt.s32.totalorder %s8, 3
    %p107 = pnand %p105, %p106
    %p108 = pneg %p107
    // Predicated region
    $region9: #{aspp_forward.3} parent=5 // pred_check
      _
    $region10: #{aspp_forward.3} parent=5 // pred_check_branch
      %110 = sbr.rel (%p107) target = $region12
    $region11: #{aspp_forward.3} parent=5 // pred_region
      %s111 = ssub.s32 %s8, 1
      // Predicated region
      $region13: #{aspp_forward.3} parent=11 // pred_check
        %p112 = pneg %p41
      $region14: #{aspp_forward.3} parent=11 // pred_check_branch
        %114 = sbr.rel (%p112) target = $region16
      $region15: #{aspp_forward.3} parent=11 // pred_region
        _
      $region16: #{aspp_forward.3} parent=11 // pred_fallthru
        _
    $region12: #{aspp_forward.3} parent=5 // pred_fallthru
      _
    %p115 = scmp.lt.s32.totalorder %s8, 2
    // Predicated region
    $region17: #{aspp_forward.3} parent=5 // pred_check
      %p116 = pneg %p115
    $region18: #{aspp_forward.3} parent=5 // pred_check_branch
      %118 = sbr.rel (%p116) target = $region20
    $region19: #{aspp_forward.3} parent=5 // pred_region
      // Predicated region
      $region21: #{aspp_forward.3} parent=19 // pred_check
        %p119 = pneg %p63
      $region22: #{aspp_forward.3} parent=19 // pred_check_branch
        %121 = sbr.rel (%p119) target = $region24
      $region23: #{aspp_forward.3} parent=19 // pred_region
        %s122 = smul.u32 2, %s16
        %p123 = scmp.lt.s32.totalorder %s15, 1
        %s124 = scalar_select %p123, %s15, 1
        %p125 = scmp.lt.s32.totalorder %s122, 1
        %s126 = scalar_select %p125, %s122, 1
        %s127 = smul.addr %s124, 2
        %s128 = sadd.s32 %s126, %s127
        %s129 = smul.addr %s128, 8
        %s130 = scalar_lea.vmem %s1, %s129
        %s131 = smul.u32 2, %s16
      $region24: #{aspp_forward.3} parent=19 // pred_fallthru
        _
    $region20: #{aspp_forward.3} parent=5 // pred_fallthru
      _
    %p132 = scmp.le.s32.totalorder 1, %s8
    %p133 = scmp.lt.s32.totalorder %s8, 3
    %p134 = pnand %p132, %p133
    %p135 = pneg %p134
    // Predicated region
    $region25: #{aspp_forward.3} parent=5 // pred_check
      _
    $region26: #{aspp_forward.3} parent=5 // pred_check_branch
      %137 = sbr.rel (%p134) target = $region28
    $region27: #{aspp_forward.3} parent=5 // pred_region
      %s138 = ssub.s32 %s8, 1
      %p139 = pneg %p41
      %p140 = pneg %p38
      %s141 = smul.u32 2, %s18
      %p142 = scmp.lt.s32.totalorder %s17, 1
      %s143 = scalar_select %p142, %s17, 1
      %p144 = scmp.lt.s32.totalorder %s141, 1
      %s145 = scalar_select %p144, %s141, 1
      %s146 = smul.addr %s143, 2
      %s147 = sadd.s32 %s145, %s146
      %s148 = smul.addr %s147, 8
      %s149 = scalar_lea.vmem %s1, %s148
      %p150 = pneg %p69
      %p151 = pneg %p66
      %p152 = pneg %p97
      %p153 = pneg %p94
      %s154 = smul.u32 2, %s18
      %p155 = scmp.lt.s32.totalorder %s17, 1
      %s156 = scalar_select %p155, %s17, 1
      %p157 = scmp.lt.s32.totalorder %s154, 1
      %s158 = scalar_select %p157, %s154, 1
      %s159 = smul.addr %s156, 2
      %s160 = sadd.s32 %s158, %s159
      %s161 = smul.addr %s160, 8
      %s162 = scalar_lea.vmem %s2, %s161
      %s163 = smul.u32 2, %s18
      %p164 = scmp.lt.s32.totalorder %s17, 1
      %s165 = scalar_select %p164, %s17, 1
      %p166 = scmp.lt.s32.totalorder %s163, 1
      %s167 = scalar_select %p166, %s163, 1
      %s168 = smul.addr %s165, 2
      %s169 = sadd.s32 %s167, %s168
      %s170 = smul.addr %s169, 8
      %s171 = scalar_lea.vmem %s1, %s170
      %s172 = smul.u32 2, %s18
      %s173 = smul.u32 2, %s18
      %p174 = scmp.lt.s32.totalorder %s17, 1
      %s175 = scalar_select %p174, %s17, 1
      %p176 = scmp.lt.s32.totalorder %s173, 1
      %s177 = scalar_select %p176, %s173, 1
      %s178 = smul.addr %s175, 2
      %s179 = sadd.s32 %s177, %s178
      %s180 = smul.addr %s179, 8
      %s181 = scalar_lea.vmem %s2, %s180
      %s182 = smul.u32 2, %s18
      %v183 = vld [vmem:[%s0] sm:$0xff]
      %v184 = vld [vmem:[%s171] sm:$0xff]
      %v185 = vld [vmem:[%s171 + $0x8] sm:$0xff]
      %187 = vset.pattern.permute.xlu0 0
      %188 = vperm.xlu0 %187, %v183
      %v189 = vpop.permute.xlu0 %188
      %v191 = vmul.f32 %v184, %v189
      %v192 = vmul.f32 %v185, %v189
      %193 = vset.pattern.permute.xlu0 1
      %194 = vperm.xlu0 %193, %v183
      %v195 = vpop.permute.xlu0 %194
      %v197 = vadd.f32 %v191, %v195
      %v198 = vadd.f32 %v192, %v195
      %v199 = vmax.f32 %v197, 0.0
      %v200 = vmax.f32 %v198, 0.0
      %201 = vst [vmem:[%s181] sm:$0xff] %v199
      %202 = vst [vmem:[%s181 + $0x8] sm:$0xff] %v200
      %s203 = smul.u32 2, %s18
      %p204 = scmp.lt.s32.totalorder %s17, 1
      %s205 = scalar_select %p204, %s17, 1
      %p206 = scmp.lt.s32.totalorder %s203, 1
      %s207 = scalar_select %p206, %s203, 1
      %s208 = smul.addr %s205, 2
      %s209 = sadd.s32 %s207, %s208
      %s210 = smul.addr %s209, 8
      %s211 = scalar_lea.vmem %s2, %s210
      // Predicated region
      $region29: #{aspp_forward.3} parent=27 // pred_check
        %p212 = pneg %p94
      $region30: #{aspp_forward.3} parent=27 // pred_check_branch
        %214 = sbr.rel (%p212) target = $region32
      $region31: #{aspp_forward.3} parent=27 // pred_region
        %s215 = smul.u32 2, %s18
      $region32: #{aspp_forward.3} parent=27 // pred_fallthru
        _
    $region28: #{aspp_forward.3} parent=5 // pred_fallthru
      _
    %p216 = scmp.le.s32.totalorder 2, %s8
    // Predicated region
    $region33: #{aspp_forward.3} parent=5 // pred_check
      %p217 = pneg %p216
    $region34: #{aspp_forward.3} parent=5 // pred_check_branch
      %219 = sbr.rel (%p217) target = $region36
    $region35: #{aspp_forward.3} parent=5 // pred_region
      %s220 = ssub.s32 %s8, 2
      // Predicated region
      $region37: #{aspp_forward.3} parent=35 // pred_check
        %p221 = pneg %p100
      $region38: #{aspp_forward.3} parent=35 // pred_check_branch
        %223 = sbr.rel (%p221) target = $region40
      $region39: #{aspp_forward.3} parent=35 // pred_region
        %s224 = smul.u32 2, %s20
        %p225 = scmp.lt.s32.totalorder %s19, 1
        %s226 = scalar_select %p225, %s19, 1
        %p227 = scmp.lt.s32.totalorder %s224, 1
        %s228 = scalar_select %p227, %s224, 1
        %s229 = smul.addr %s226, 2
        %s230 = sadd.s32 %s228, %s229
        %s231 = smul.addr %s230, 8
        %s232 = scalar_lea.vmem %s2, %s231
      $region40: #{aspp_forward.3} parent=35 // pred_fallthru
        _
    $region36: #{aspp_forward.3} parent=5 // pred_fallthru
      _
  $region6: #{aspp_forward.3} parent=0 // loop_footer
    %s12 = sadd.s32 1, %s8
  $region7: #{aspp_forward.3} parent=0 // loop_footer_branch
    %7 = sbr.rel target = $region3
  $region8: #{aspp_forward.3} parent=0 // loop_exit
    _

// kernel: aspp_forward.2
$region0: #{aspp_forward.2}
  #allocation0 [shape = 'u32[]', space=smem, size = 0x4, offset = 0x4, fixed_abs, tag = 'smem constant byte address 0x4 - core index']
  #allocation1 [shape = 'u32[144,128]{1,0:T(1,128)}', space=vmem, size = 0x12000, scoped, tag = 'internal scratch']
  #allocation2 [shape = 'f32[8,3]{1,0:T(8,128)}', space=vmem, size = 0x1000, scoped, tag = 'scratch operand']
  %s0 = inlined_call_operand.vmem [shape: f32[2,4,256], index: 0, kind: input, shape index: {}]
  %s1 = inlined_call_operand.vmem [shape: f32[8,4], index: 1, kind: input, shape index: {}]
  %s2 = inlined_call_operand.vmem [shape: f32[2,8,256], index: 2, kind: output, shape index: {0}]
  %s3 = inlined_call_operand.vmem [shape: f32[2,8,3], index: 3, kind: output, shape index: {1}]
  %4 = xla_tuple %s2, %s3
  %s5 = sld [smem:[#allocation0]]
  $region57: #{aspp_forward.2} parent=0
    _
  %s7 = ssub.s32 1, %s5
  %s8 = scalar_select 0, %s7, %s5
  loop: start=0, step=1, limit=4
  $region2: #{aspp_forward.2} parent=0 // loop_pre_header
    _
  $region3: #{aspp_forward.2} parent=0 // loop_header
    %s10 = sphi 0, %s14
    %p11 = scmp.ge.s32.totalorder %s10, 4
    %s17 = sphi 0, %s29
    %s18 = sphi 0, %s25
    %s19 = sphi 0, %s17
    %s20 = sphi 0, %s18
    %s21 = sphi 0, %s19
    %s22 = sphi 0, %s20
    %s34 = sphi 0, %s36
    %s37 = sphi 0, %s34
    %s38 = sphi 0, %s37
    %s54 = sphi 0, %s38
    %s58 = sphi 0, %s58
    %s60 = sphi 0, %s58
    %s61 = sphi 0, %s60
    %s75 = sphi 0, %s61
    %s83 = sphi 0, %s85
    %s86 = sphi 0, %s83
    %s87 = sphi 0, %s86
    %s103 = sphi 0, %s87
    %s109 = sphi 0, %s111
    %s112 = sphi 0, %s109
    %s113 = sphi 0, %s112
    %s129 = sphi 0, %s113
  $region4: #{aspp_forward.2} parent=0 // loop_header_branch
    %13 = sbr.rel (%p11) target = $region8
  $region5: #{aspp_forward.2} parent=0 // loop_body
    %s15 = ssub.s32 %s10, 1
    %s16 = ssub.s32 %s10, 2
    %s23 = sadd.s32 1, %s18
    %p24 = scmp.ge.s32.totalorder %s23, 1
    %s25 = scalar_select %p24, 0, %s23
    %s26 = sadd.s32 1, %s17
    %s27 = scalar_select %p24, %s26, %s17
    %p28 = scmp.ge.s32.totalorder %s27, 2
    %s29 = scalar_select %p28, 0, %s27
    %s30 = ssub.s32 %s17, %s29
    %s31 = ssub.s32 %s18, %s25
    %s32 = sor.u32 %s30, %s31
    %p33 = scmp.eq.s32.totalorder %s32, 0
    %s35 = sadd.s32 %s34, 1
    %s36 = scalar_select %p33, %s34, %s35
    %p39 = pneg %p33
    %p40 = scmp.eq.s32.totalorder %s10, 1
    %p41 = por %p39, %p40
    %p42 = scmp.ne.s32.totalorder %s34, %s37
    %p43 = scmp.eq.s32.totalorder %s10, 0
    %p44 = por %p42, %p43
    %p45 = scmp.ne.s32.totalorder %s34, %s37
    %p46 = scmp.eq.s32.totalorder %s15, 1
    %p47 = por %p45, %p46
    %p48 = scmp.ne.s32.totalorder %s37, %s38
    %p49 = scmp.eq.s32.totalorder %s15, 0
    %p50 = por %p48, %p49
    %p51 = scmp.ne.s32.totalorder %s37, %s38
    %p52 = scmp.eq.s32.totalorder %s16, 1
    %p53 = por %p51, %p52
    %p55 = scmp.ne.s32.totalorder %s38, %s54
    %p56 = scmp.eq.s32.totalorder %s16, 0
    %p57 = por %p55, %p56
    %s59 = sadd.s32 %s58, 1
    %p62 = scmp.eq.s32.totalorder %s10, 1
    %p63 = scmp.ne.s32.totalorder %s58, %s60
    %p64 = scmp.eq.s32.totalorder %s10, 0
    %p65 = por %p63, %p64
    %p66 = scmp.ne.s32.totalorder %s58, %s60
    %p67 = scmp.eq.s32.totalorder %s15, 1
    %p68 = por %p66, %p67
    %p69 = scmp.ne.s32.totalorder %s60, %s61
    %p70 = scmp.eq.s32.totalorder %s15, 0
    %p71 = por %p69, %p70
    %p72 = scmp.ne.s32.totalorder %s60, %s61
    %p73 = scmp.eq.s32.totalorder %s16, 1
    %p74 = por %p72, %p73
    %p76 = scmp.ne.s32.totalorder %s61, %s75
    %p77 = scmp.eq.s32.totalorder %s16, 0
    %p78 = por %p76, %p77
    %s79 = ssub.s32 %s17, %s29
    %s80 = ssub.s32 %s18, %s25
    %s81 = sor.u32 %s79, %s80
    %p82 = scmp.eq.s32.totalorder %s81, 0
    %s84 = sadd.s32 %s83, 1
    %s85 = scalar_select %p82, %s83, %s84
    %p88 = pneg %p82
    %p89 = scmp.eq.s32.totalorder %s10, 1
    %p90 = por %p88, %p89
    %p91 = scmp.ne.s32.totalorder %s83, %s86
    %p92 = scmp.eq.s32.totalorder %s10, 0
    %p93 = por %p91, %p92
    %p94 = scmp.ne.s32.totalorder %s83, %s86
    %p95 = scmp.eq.s32.totalorder %s15, 1
    %p96 = por %p94, %p95
    %p97 = scmp.ne.s32.totalorder %s86, %s87
    %p98 = scmp.eq.s32.totalorder %s15, 0
    %p99 = por %p97, %p98
    %p100 = scmp.ne.s32.totalorder %s86, %s87
    %p101 = scmp.eq.s32.totalorder %s16, 1
    %p102 = por %p100, %p101
    %p104 = scmp.ne.s32.totalorder %s87, %s103
    %p105 = scmp.eq.s32.totalorder %s16, 0
    %p106 = por %p104, %p105
    %s107 = ssub.s32 %s17, %s29
    %p108 = scmp.eq.s32.totalorder %s107, 0
    %s110 = sadd.s32 %s109, 1
    %s111 = scalar_select %p108, %s109, %s110
    %p114 = pneg %p108
    %p115 = scmp.eq.s32.totalorder %s10, 1
    %p116 = por %p114, %p115
    %p117 = scmp.ne.s32.totalorder %s109, %s112
    %p118 = scmp.eq.s32.totalorder %s10, 0
    %p119 = por %p117, %p118
    %p120 = scmp.ne.s32.totalorder %s109, %s112
    %p121 = scmp.eq.s32.totalorder %s15, 1
    %p122 = por %p120, %p121
    %p123 = scmp.ne.s32.totalorder %s112, %s113
    %p124 = scmp.eq.s32.totalorder %s15, 0
    %p125 = por %p123, %p124
    %p126 = scmp.ne.s32.totalorder %s112, %s113
    %p127 = scmp.eq.s32.totalorder %s16, 1
    %p128 = por %p126, %p127
    %p130 = scmp.ne.s32.totalorder %s113, %s129
    %p131 = scmp.eq.s32.totalorder %s16, 0
    %p132 = por %p130, %p131
    %p133 = scmp.le.s32.totalorder 1, %s10
    %p134 = scmp.lt.s32.totalorder %s10, 3
    %p135 = pnand %p133, %p134
    %p136 = pneg %p135
    // Predicated region
    $region9: #{aspp_forward.2} parent=5 // pred_check
      _
    $region10: #{aspp_forward.2} parent=5 // pred_check_branch
      %138 = sbr.rel (%p135) target = $region12
    $region11: #{aspp_forward.2} parent=5 // pred_region
      %s139 = ssub.s32 %s10, 1
      // Predicated region
      $region13: #{aspp_forward.2} parent=11 // pred_check
        %p140 = pneg %p71
      $region14: #{aspp_forward.2} parent=11 // pred_check_branch
        %142 = sbr.rel (%p140) target = $region16
      $region15: #{aspp_forward.2} parent=11 // pred_region
        _
      $region16: #{aspp_forward.2} parent=11 // pred_fallthru
        _
    $region12: #{aspp_forward.2} parent=5 // pred_fallthru
      _
    %p143 = scmp.lt.s32.totalorder %s10, 2
    // Predicated region
    $region17: #{aspp_forward.2} parent=5 // pred_check
      %p144 = pneg %p143
    $region18: #{aspp_forward.2} parent=5 // pred_check_branch
      %146 = sbr.rel (%p144) target = $region20
    $region19: #{aspp_forward.2} parent=5 // pred_region
      // Predicated region
      $region21: #{aspp_forward.2} parent=19 // pred_check
        %p147 = pneg %p44
      $region22: #{aspp_forward.2} parent=19 // pred_check_branch
        %149 = sbr.rel (%p147) target = $region24
      $region23: #{aspp_forward.2} parent=19 // pred_region
        %s150 = smul.u32 2, %s18
        %p151 = scmp.lt.s32.totalorder %s17, 1
        %s152 = scalar_select %p151, %s17, 1
        %p153 = scmp.lt.s32.totalorder %s150, 1
        %s154 = scalar_select %p153, %s150, 1
        %s155 = smul.addr %s152, 2
        %s156 = sadd.s32 %s154, %s155
        %s157 = smul.addr %s156, 4
        %s158 = scalar_lea.vmem %s0, %s157
        %s159 = smul.u32 2, %s18
      $region24: #{aspp_forward.2} parent=19 // pred_fallthru
        _
    $region20: #{aspp_forward.2} parent=5 // pred_fallthru
      _
    %p160 = scmp.le.s32.totalorder 1, %s10
    %p161 = scmp.lt.s32.totalorder %s10, 3
    %p162 = pnand %p160, %p161
    %p163 = pneg %p162
    // Predicated region
    $region25: #{aspp_forward.2} parent=5 // pred_check
      _
    $region26: #{aspp_forward.2} parent=5 // pred_check_branch
      %165 = sbr.rel (%p162) target = $region28
    $region27: #{aspp_forward.2} parent=5 // pred_region
      %s166 = ssub.s32 %s10, 1
      %s167 = smul.u32 2, %s20
      %p168 = scmp.lt.s32.totalorder %s19, 1
      %s169 = scalar_select %p168, %s19, 1
      %p170 = scmp.lt.s32.totalorder %s167, 1
      %s171 = scalar_select %p170, %s167, 1
      %s172 = smul.addr %s169, 2
      %s173 = sadd.s32 %s171, %s172
      %s174 = smul.addr %s173, 4
      %s175 = scalar_lea.vmem %s0, %s174
      %p176 = pneg %p50
      %p177 = pneg %p47
      %p178 = pneg %p71
      %p179 = pneg %p68
      %p180 = pneg %p99
      %p181 = pneg %p96
      %s182 = smul.u32 2, %s20
      %p183 = scmp.lt.s32.totalorder %s19, 1
      %s184 = scalar_select %p183, %s19, 1
      %p185 = scmp.lt.s32.totalorder %s182, 1
      %s186 = scalar_select %p185, %s182, 1
      %s187 = smul.addr %s184, 2
      %s188 = sadd.s32 %s186, %s187
      %s189 = smul.addr %s188, 8
      %s190 = scalar_lea.vmem %s2, %s189
      %p191 = pneg %p125
      %p192 = pneg %p122
      %p193 = scmp.lt.s32.totalorder %s19, 1
      %s194 = scalar_select %p193, %s19, 1
      %s195 = smul.addr %s194, 8
      %s196 = scalar_lea.vmem %s3, %s195
      %s197 = smul.u32 2, %s20
      %p198 = scmp.lt.s32.totalorder %s19, 1
      %s199 = scalar_select %p198, %s19, 1
      %p200 = scmp.lt.s32.totalorder %s197, 1
      %s201 = scalar_select %p200, %s197, 1
      %s202 = smul.addr %s199, 2
      %s203 = sadd.s32 %s201, %s202
      %s204 = smul.addr %s203, 4
      %s205 = scalar_lea.vmem %s0, %s204
      %s206 = smul.u32 2, %s20
      %s207 = smul.u32 2, %s20
      %p208 = scmp.lt.s32.totalorder %s19, 1
      %s209 = scalar_select %p208, %s19, 1
      %p210 = scmp.lt.s32.totalorder %s207, 1
      %s211 = scalar_select %p210, %s207, 1
      %s212 = smul.addr %s209, 2
      %s213 = sadd.s32 %s211, %s212
      %s214 = smul.addr %s213, 8
      %s215 = scalar_lea.vmem %s2, %s214
      %s216 = smul.u32 2, %s20
      %p217 = scmp.lt.s32.totalorder %s19, 1
      %s218 = scalar_select %p217, %s19, 1
      %s219 = smul.addr %s218, 8
      %s220 = scalar_lea.vmem %s3, %s219
      %v221 = vld [vmem:[%s1] sm:$0xff]
      %v222 = vld [vmem:[%s205] sm:$0xff]
      %v224 = vcombine.high %v222, %v222
      %vm225 = vcmask 31744
      %v227 = vsel %vm225, %v221, 0
      %vm229 = vcmask 1043456
      %v230 = vsel %vm229, %v222, 0
      %v232 = vsel %vm229, %v224, 0
      %234 = vmatprep.subr.mxu0 %v232
      %235 = vmatpush1.msra.mxu0 %v230
      %236 = vmatprep.subr.mxu0 0.0
      %237 = vmatpush1.msra.mxu0 0.0
      %238 = vmatprep.subr.mxu0 0.0
      %239 = vmatpush1.msra.mxu0 0.0
      %240 = vmatprep.subr.mxu0 0.0
      %241 = vmatpush1.msra.mxu0 0.0
      %242 = vmatprep.subr.mxu0 0.0
      %243 = vmatpush1.msra.mxu0 0.0
      %244 = vmatprep.subr.mxu0 0.0
      %245 = vmatpush1.msra.mxu0 0.0
      %246 = vmatprep.subr.mxu0 0.0
      %247 = vmatpush1.msra.mxu0 0.0
      %248 = vmatprep.subr.mxu0 0.0
      %249 = vmatpush1.msra.mxu0 0.0
      %250 = vmatprep.subr.mxu0 0.0
      %251 = vmatpush1.msra.mxu0 0.0
      %252 = vmatprep.subr.mxu0 0.0
      %253 = vmatpush1.msra.mxu0 0.0
      %254 = vmatprep.subr.mxu0 0.0
      %255 = vmatpush1.msra.mxu0 0.0
      %256 = vmatprep.subr.mxu0 0.0
      %257 = vmatpush1.msra.mxu0 0.0
      %258 = vmatprep.subr.mxu0 0.0
      %259 = vmatpush1.msra.mxu0 0.0
      %260 = vmatprep.subr.mxu0 0.0
      %261 = vmatpush1.msra.mxu0 0.0
      %262 = vmatprep.subr.mxu0 0.0
      %263 = vmatpush1.msra.mxu0 0.0
      %264 = vmatprep.subr.mxu0 0.0
      %265 = vmatpush1.msra.mxu0 0.0
      %266 = vmatprep.subr.mxu0 0.0
      %267 = vmatpush1.msra.mxu0 0.0
      %268 = vmatprep.subr.mxu0 0.0
      %269 = vmatpush1.msra.mxu0 0.0
      %270 = vmatprep.subr.mxu0 0.0
      %271 = vmatpush1.msra.mxu0 0.0
      %272 = vmatprep.subr.mxu0 0.0
      %273 = vmatpush1.msra.mxu0 0.0
      %274 = vmatprep.subr.mxu0 0.0
      %275 = vmatpush1.msra.mxu0 0.0
      %276 = vmatprep.subr.mxu0 0.0
      %277 = vmatpush1.msra.mxu0 0.0
      %278 = vmatprep.subr.mxu0 0.0
      %279 = vmatpush1.msra.mxu0 0.0
      %280 = vmatprep.subr.mxu0 0.0
      %281 = vmatpush1.msra.mxu0 0.0
      %282 = vmatprep.subr.mxu0 0.0
      %283 = vmatpush1.msra.mxu0 0.0
      %284 = vmatprep.subr.mxu0 0.0
      %285 = vmatpush1.msra.mxu0 0.0
      %286 = vmatprep.subr.mxu0 0.0
      %287 = vmatpush1.msra.mxu0 0.0
      %288 = vmatprep.subr.mxu0 0.0
      %289 = vmatpush1.msra.mxu0 0.0
      %290 = vmatprep.subr.mxu0 0.0
      %291 = vmatpush1.msra.mxu0 0.0
      %292 = vmatprep.subr.mxu0 0.0
      %293 = vmatpush1.msra.mxu0 0.0
      %294 = vmatprep.subr.mxu0 0.0
      %295 = vmatpush1.msra.mxu0 0.0
      %296 = vmatprep.subr.mxu0 0.0
      %297 = vmatpush1.msra.mxu0 0.0
      %298 = vmatprep.mubr.f32.mxu0 0.0
      %299 = vmatmul.mubr.f32.gmra.mrb[0].mxu0 %v227
      %v300 = vpop.f32.mrb[0].mxu0
      %v301 = vadd.f32 0.0, %v300
      %v302 = vpop.f32.mrb[0].mxu0
      %v303 = vadd.f32 0.0, %v302
      %304 = vdwg.mxu0
      %305 = vst [vmem:[%s215] sm:$0xff] %v301
      %306 = vst [vmem:[%s215 + $0x8] sm:$0xff] %v303
      %p307 = scmp.eq.s32.totalorder %s20, 0
      // Predicated region
      $region29: #{aspp_forward.2} parent=27 // pred_check
        %p308 = pneg %p307
      $region30: #{aspp_forward.2} parent=27 // pred_check_branch
        %310 = sbr.rel (%p308) target = $region32
      $region31: #{aspp_forward.2} parent=27 // pred_region
        %v311 = vadd.f32 %v301, %v303
        %312 = vadd.xlane.f32.xlu0 %v311
        %v313 = vpop.xlane.xlu0 %312
        %v314 = vmul.f32 %v313, 0.00390625
        %vm315 = vcmask 7168
        %v316 = vsel %vm315, %v314, 0.0
        %vm317 = vcmask 23552
        %318 = vst.msk [vmem:[#allocation2] sm:$0xff] %vm317, %v316
      $region32: #{aspp_forward.2} parent=27 // pred_fallthru
        _
      %v319 = vld [vmem:[#allocation2] sm:$0xff]
      %321 = vset.pattern.permute.xlu0 0
      %322 = vperm.xlu0 %321, %v319
      %v323 = vpop.permute.xlu0 %322
      %v325 = vsub.f32 %v301, %v323
      %v326 = vsub.f32 %v303, %v323
      %v327 = vadd.f32 %v325, %v326
      %328 = vadd.xlane.f32.xlu0 %v327
      %v329 = vpop.xlane.xlu0 %328
      %v330 = vmul.f32 %v325, %v325
      %v331 = vmul.f32 %v326, %v326
      %v332 = vadd.f32 %v330, %v331
      %333 = vadd.xlane.f32.xlu0 %v332
      %v334 = vpop.xlane.xlu0 %333
      %vm335 = vcmask 7168
      %v336 = vsel %vm335, %v329, %v334
      %338 = vrot.lane.b32.xlu0 %v336, 1
      %v339 = vpop.permute.xlu0 %338
      %v341 = vadd.f32 %v319, %v339
      %vm342 = vcmask 23560
      %343 = vst.msk [vmem:[#allocation2] sm:$0xff] %vm342, %v341
      // Predicated region
      $region33: #{aspp_forward.2} parent=27 // pred_check
        %p344 = pneg %p307
      $region34: #{aspp_forward.2} parent=27 // pred_check_branch
        %346 = sbr.rel (%p344) target = $region36
      $region35: #{aspp_forward.2} parent=27 // pred_region
        %v347 = vld [vmem:[#allocation2] sm:$0xff]
        %vm348 = vcmask 23552
        %349 = vst.msk [vmem:[%s220] sm:$0xff] %vm348, %v347
      $region36: #{aspp_forward.2} parent=27 // pred_fallthru
        _
      %s350 = smul.u32 2, %s20
      %p351 = scmp.lt.s32.totalorder %s19, 1
      %s352 = scalar_select %p351, %s19, 1
      %p353 = scmp.lt.s32.totalorder %s350, 1
      %s354 = scalar_select %p353, %s350, 1
      %s355 = smul.addr %s352, 2
      %s356 = sadd.s32 %s354, %s355
      %s357 = smul.addr %s356, 8
      %s358 = scalar_lea.vmem %s2, %s357
      %p359 = scmp.lt.s32.totalorder %s19, 1
      %s360 = scalar_select %p359, %s19, 1
      %s361 = smul.addr %s360, 8
      %s362 = scalar_lea.vmem %s3, %s361
      // Predicated region
      $region37: #{aspp_forward.2} parent=27 // pred_check
        %p363 = pneg %p96
      $region38: #{aspp_forward.2} parent=27 // pred_check_branch
        %365 = sbr.rel (%p363) target = $region40
      $region39: #{aspp_forward.2} parent=27 // pred_region
        %s366 = smul.u32 2, %s20
      $region40: #{aspp_forward.2} parent=27 // pred_fallthru
        _
      // Predicated region
      $region41: #{aspp_forward.2} parent=27 // pred_check
        %p367 = pneg %p122
      $region42: #{aspp_forward.2} parent=27 // pred_check_branch
        %369 = sbr.rel (%p367) target = $region44
      $region43: #{aspp_forward.2} parent=27 // pred_region
        _
      $region44: #{aspp_forward.2} parent=27 // pred_fallthru
        _
    $region28: #{aspp_forward.2} parent=5 // pred_fallthru
      _
    %p370 = scmp.le.s32.totalorder 2, %s10
    // Predicated region
    $region45: #{aspp_forward.2} parent=5 // pred_check
      %p371 = pneg %p370
    $region46: #{aspp_forward.2} parent=5 // pred_check_branch
      %373 = sbr.rel (%p371) target = $region48
    $region47: #{aspp_forward.2} parent=5 // pred_region
      %s374 = ssub.s32 %s10, 2
      // Predicated region
      $region49: #{aspp_forward.2} parent=47 // pred_check
        %p375 = pneg %p102
      $region50: #{aspp_forward.2} parent=47 // pred_check_branch
        %377 = sbr.rel (%p375) target = $region52
      $region51: #{aspp_forward.2} parent=47 // pred_region
        %s378 = smul.u32 2, %s22
        %p379 = scmp.lt.s32.totalorder %s21, 1
        %s380 = scalar_select %p379, %s21, 1
        %p381 = scmp.lt.s32.totalorder %s378, 1
        %s382 = scalar_select %p381, %s378, 1
        %s383 = smul.addr %s380, 2
        %s384 = sadd.s32 %s382, %s383
        %s385 = smul.addr %s384, 8
        %s386 = scalar_lea.vmem %s2, %s385
      $region52: #{aspp_forward.2} parent=47 // pred_fallthru
        _
      // Predicated region
      $region53: #{aspp_forward.2} parent=47 // pred_check
        %p387 = pneg %p128
      $region54: #{aspp_forward.2} parent=47 // pred_check_branch
        %389 = sbr.rel (%p387) target = $region56
      $region55: #{aspp_forward.2} parent=47 // pred_region
        %p390 = scmp.lt.s32.totalorder %s21, 1
        %s391 = scalar_select %p390, %s21, 1
        %s392 = smul.addr %s391, 8
        %s393 = scalar_lea.vmem %s3, %s392
      $region56: #{aspp_forward.2} parent=47 // pred_fallthru
        _
    $region48: #{aspp_forward.2} parent=5 // pred_fallthru
      _
  $region6: #{aspp_forward.2} parent=0 // loop_footer
    %s14 = sadd.s32 1, %s10
  $region7: #{aspp_forward.2} parent=0 // loop_footer_branch
    %9 = sbr.rel target = $region3
  $region8: #{aspp_forward.2} parent=0 // loop_exit
    _

</llo_original>
